<compile_context>
chip_gen: v7x
topology: tpu7x:2x2x1
jax: 0.10.0
libtpu: 0.0.40
codegen_flags: <defaults>
</compile_context>

<pallas_src>
import jax
import jax.numpy as jnp
from jax import lax
from jax.experimental import pallas as pl
from jax.experimental.pallas import tpu as pltpu

_BN_EPS = 1e-5
_MIB = 1024 * 1024


# ---------------------------------------------------------------------------
# VMEM budgeting / tile selection helpers
# ---------------------------------------------------------------------------

def _vmem_capacity_bytes():
    """Best-effort physical VMEM capacity (v5e/v6e: 128 MiB, v7x: 64 MiB)."""
    try:
        return int(pltpu.get_tpu_info().vmem_capacity_bytes)
    except Exception:
        return 64 * _MIB  # conservative default, safe on all generations


def _pick_row_tile(h, w, cin, cout, in_bytes, out_bytes, budget_bytes):
    """Largest even row tile t with h % t == 0 and (t*w) % 128 == 0 (or t == h)
    whose estimated per-step VMEM footprint fits the budget."""
    cands = [t for t in range(2, h + 1, 2)
             if h % t == 0 and ((t * w) % 128 == 0 or t == h)]
    if not cands:
        raise ValueError(
            f"cannot tile H={h}, W={w}: need an even row tile dividing H "
            f"(with row_tile*W a multiple of 128, or row_tile == H)")
    wp = w + 2

    def est(t):
        xa = 2 * t * wp * cin * in_bytes          # double-buffered input band
        xb = 2 * 2 * wp * cin * in_bytes          # double-buffered 2-row halo
        wgt = 2 * cout * 9 * cin * in_bytes       # K-packed weights
        out = 2 * cout * t * w * out_bytes        # double-buffered output band
        band = (t + 2) * wp * cin * in_bytes      # assembled halo band (value)
        lhs = 2 * 9 * cin * t * w * in_bytes      # im2col LHS + concat temp
        acc = 2 * cout * t * w * 4                # f32 matmul result + biased copy
        return int(1.25 * (xa + xb + wgt + out + band + lhs + acc))

    fitting = [t for t in cands if est(t) <= budget_bytes]
    return max(fitting) if fitting else min(cands)


def _pick_spatial_tile(hw, cout, in_bytes, budget_bytes):
    """Large lane-dense spatial tile for the elementwise BN-apply pass."""
    cands = [d for d in range(128, hw + 1, 128) if hw % d == 0]
    if not cands:
        return hw

    def est(d):
        return 2 * cout * d * (in_bytes + 4)      # double-buffered in + out blocks

    fitting = [d for d in cands if est(d) <= budget_bytes]
    return max(fitting) if fitting else min(cands)


# ---------------------------------------------------------------------------
# Kernel 1: fused 3x3 conv (K-packed im2col, single matmul) + bias + BN stats
# ---------------------------------------------------------------------------

def _make_conv_kernel(compute_stats):
    def kernel(xa_ref, xb_ref, w_ref, bias_ref, out_ref, *stats_refs):
        # xa_ref:   (1, TH, W+2, Cin)  row band of the padded NHWC input
        # xb_ref:   (1, 2,  W+2, Cin)  2-row bottom halo (first 2 rows of next band)
        # w_ref:    (Cout, 9*Cin)      K-packed 3x3 weights, col = (dy*3+dx)*Cin + ci
        # bias_ref: (Cout, 1)          conv bias (f32)
        # out_ref:  (1, Cout, TH*W)    channel-major conv output (lane dim = TH*W)
        # stats:    (1, 1, Cout, 2)    per-band [sum, sumsq] (only if compute_stats)
        _, th, wp, cin = xa_ref.shape
        w_out = wp - 2

        # Assemble the (TH+2)-row halo band from the two non-overlapping blocks.
        band = jnp.concatenate([xa_ref[0], xb_ref[0]], axis=0)   # (TH+2, W+2, Cin)

        # im2col: K-pack the 9 taps into one (TH*W, 9*Cin) LHS -> a single MXU
        # matmul instead of nine K=Cin matmuls with VPU accumulation.
        pieces = []
        for dy in range(3):
            for dx in range(3):
                win = band[dy:dy + th, dx:dx + w_out, :]          # (TH, W, Cin)
                pieces.append(win.reshape(th * w_out, cin))
        patches = jnp.concatenate(pieces, axis=1)                 # (TH*W, 9*Cin)

        # Channel-major matmul: contract the 9*Cin dim of both operands,
        # (Cout, 9*Cin) x (TH*W, 9*Cin)^T -> (Cout, TH*W), f32 accumulation.
        y = lax.dot_general(w_ref[...], patches, (((1,), (1,)), ((), ())),
                            preferred_element_type=jnp.float32)
        y = y + bias_ref[...]                                     # (Cout, TH*W)
        out_ref[0] = y.astype(out_ref.dtype)

        if compute_stats:
            stats_ref = stats_refs[0]
            s = jnp.sum(y, axis=1, keepdims=True)                 # (Cout, 1)
            ss = jnp.sum(y * y, axis=1, keepdims=True)            # (Cout, 1)
            stats_ref[0, 0] = jnp.concatenate([s, ss], axis=1)    # (Cout, 2)

    return kernel


# ---------------------------------------------------------------------------
# Kernel 2: apply folded BatchNorm (y * scale + shift), channel-major tiles
# ---------------------------------------------------------------------------

def _bn_apply_kernel(y_ref, scale_ref, shift_ref, out_ref):
    # y_ref/out_ref: (1, Cout, TS); scale/shift: (Cout, 1) broadcast over lanes.
    out_ref[0] = y_ref[0].astype(jnp.float32) * scale_ref[...] + shift_ref[...]


# ---------------------------------------------------------------------------
# Wrapper
# ---------------------------------------------------------------------------

def layer_wrapper_2d_forward(x, conv_w, conv_b, bn_gamma, bn_beta,
                             rescale=True, *, row_tile=None, mxu_bf16=True):
    """x: [N, Cin, H, W]; conv_w: [Cout, Cin, 3, 3]; conv_b/gamma/beta: [Cout].

    Returns [N, Cout, H, W]: BN(conv(x)) if rescale else conv(x).
    """
    n, cin, h, w = x.shape
    cout, cin_w, kh, kw = conv_w.shape
    assert cin_w == cin and (kh, kw) == (3, 3), "kernel targets 3x3 pad=1 convs"
    # TODO(synk): generalize to other kernel sizes / strides of the wrapped layer.

    compute_dtype = jnp.bfloat16 if mxu_bf16 else jnp.float32
    in_bytes = 2 if mxu_bf16 else 4
    # bf16 intermediate halves the conv_out write and the BN-apply read; BN stats
    # are accumulated in f32 inside kernel 1 before the downcast.
    interm_dtype = jnp.bfloat16 if (rescale and mxu_bf16) else jnp.float32
    out_bytes = 2 if interm_dtype == jnp.bfloat16 else 4

    # Generation-aware VMEM budget (v7x: 64 MiB physical, v5e/v6e: 128 MiB).
    cap = _vmem_capacity_bytes()
    vmem_limit = int(max(32 * _MIB, min(cap - 16 * _MIB, 100 * _MIB)))
    block_budget = int(0.6 * vmem_limit)

    if row_tile is None:
        row_tile = _pick_row_tile(h, w, cin, cout, in_bytes, out_bytes, block_budget)
    if not (h % row_tile == 0 and row_tile % 2 == 0
            and ((row_tile * w) % 128 == 0 or row_tile == h)):
        raise ValueError(f"invalid row_tile={row_tile} for H={h}, W={w}")
    th = row_tile
    n_bands = h // th
    hw = h * w
    wp = w + 2

    # --- glue: NCHW -> padded NHWC + cast (one small pass over the input) ---
    # TODO(synk): fold the transpose/pad into the kernel (in-VMEM halo zero-fill +
    # manual band DMA) to remove this input-sized HBM round trip entirely.
    xp = jnp.pad(jnp.transpose(x, (0, 2, 3, 1)),
                 ((0, 0), (1, 1), (1, 1), (0, 0))).astype(compute_dtype)

    # (Cout, Cin, 3, 3) -> (Cout, 3, 3, Cin) -> (Cout, 9*Cin); col = tap*Cin + ci.
    w9 = jnp.transpose(conv_w, (0, 2, 3, 1)).reshape(cout, 9 * cin).astype(compute_dtype)
    bias_col = conv_b.astype(jnp.float32).reshape(cout, 1)

    conv_in_specs = [
        # TH-row band of the padded image (block index r along padded H).
        pl.BlockSpec((1, th, wp, cin), lambda i, r: (i, r, 0, 0)),
        # 2-row bottom halo = first 2 rows of the next band (block of 2 rows).
        pl.BlockSpec((1, 2, wp, cin), lambda i, r: (i, (r + 1) * (th // 2), 0, 0)),
        pl.BlockSpec((cout, 9 * cin), lambda i, r: (0, 0)),
        pl.BlockSpec((cout, 1), lambda i, r: (0, 0)),
    ]
    conv_out_spec = pl.BlockSpec((1, cout, th * w), lambda i, r: (i, 0, r))
    cparams = pltpu.CompilerParams(
        dimension_semantics=("parallel", "parallel"),
        vmem_limit_bytes=vmem_limit)

    if rescale:
        stats_spec = pl.BlockSpec((1, 1, cout, 2), lambda i, r: (i, r, 0, 0))
        conv_out, stats = pl.pallas_call(
            _make_conv_kernel(True),
            out_shape=(jax.ShapeDtypeStruct((n, cout, hw), interm_dtype),
                       jax.ShapeDtypeStruct((n, n_bands, cout, 2), jnp.float32)),
            grid=(n, n_bands),
            in_specs=conv_in_specs,
            out_specs=(conv_out_spec, stats_spec),
            compiler_params=cparams,
        )(xp, xp, w9, bias_col)
    else:
        # Stats math and the stats output stream are skipped entirely.
        conv_out = pl.pallas_call(
            _make_conv_kernel(False),
            out_shape=jax.ShapeDtypeStruct((n, cout, hw), jnp.float32),
            grid=(n, n_bands),
            in_specs=conv_in_specs,
            out_specs=conv_out_spec,
            compiler_params=cparams,
        )(xp, xp, w9, bias_col)
        return conv_out.reshape(n, cout, h, w)      # free reshape (NCHW already)

    # --- tiny per-channel reduction of per-band partial sums (plain JAX) ---
    m_total = float(n * hw)
    sums = jnp.sum(stats[..., 0], axis=(0, 1))       # (Cout,)
    sumsqs = jnp.sum(stats[..., 1], axis=(0, 1))     # (Cout,)
    mean = sums / m_total
    # TODO(synk): Welford-style per-band (count, mean, M2) merge would avoid the
    # E[x^2] - mean^2 cancellation for activations with large mean vs spread.
    var = jnp.maximum(sumsqs / m_total - mean * mean, 0.0)   # biased (training BN)
    scale = bn_gamma.astype(jnp.float32) * lax.rsqrt(var + _BN_EPS)
    shift = bn_beta.astype(jnp.float32) - mean * scale

    # --- BN apply: y * scale + shift, retiled with large lane-dense blocks ---
    ts = _pick_spatial_tile(hw, cout, out_bytes, block_budget)
    alias = {0: 0} if interm_dtype == jnp.float32 else {}
    bn_out = pl.pallas_call(
        _bn_apply_kernel,
        out_shape=jax.ShapeDtypeStruct((n, cout, hw), jnp.float32),
        grid=(n, hw // ts),
        in_specs=[
            pl.BlockSpec((1, cout, ts), lambda i, s: (i, 0, s)),
            pl.BlockSpec((cout, 1), lambda i, s: (0, 0)),
            pl.BlockSpec((cout, 1), lambda i, s: (0, 0)),
        ],
        out_specs=pl.BlockSpec((1, cout, ts), lambda i, s: (i, 0, s)),
        compiler_params=cparams,
        input_output_aliases=alias,
    )(conv_out, scale.reshape(cout, 1), shift.reshape(cout, 1))

    return bn_out.reshape(n, cout, h, w)             # free reshape (NCHW already)


# ---------------------------------------------------------------------------
# Reference (pure JAX) for correctness checks
# ---------------------------------------------------------------------------

def _reference_forward(x, conv_w, conv_b, bn_gamma, bn_beta, rescale=True):
    y = lax.conv_general_dilated(
        x, conv_w, window_strides=(1, 1), padding="SAME",
        dimension_numbers=("NCHW", "OIHW", "NCHW"))
    y = y + conv_b.reshape(1, -1, 1, 1)
    if not rescale:
        return y
    mean = jnp.mean(y, axis=(0, 2, 3), keepdims=True)
    var = jnp.mean((y - mean) ** 2, axis=(0, 2, 3), keepdims=True)
    y_hat = (y - mean) * lax.rsqrt(var + _BN_EPS)
    return y_hat * bn_gamma.reshape(1, -1, 1, 1) + bn_beta.reshape(1, -1, 1, 1)


# ---------------------------------------------------------------------------
# Main
# ---------------------------------------------------------------------------

if __name__ == "__main__":
    key = jax.random.PRNGKey(0)
    k_x, k_w, k_b = jax.random.split(key, 3)

    N, CIN, COUT, H, W = 2, 4, 8, 16, 16

    x = jax.random.normal(k_x, (N, CIN, H, W), dtype=jnp.float32)
    # Wrapped layer = Conv2d(CIN, COUT, kernel_size=3, padding=1, bias=True)
    conv_w = jax.random.normal(k_w, (COUT, CIN, 3, 3), dtype=jnp.float32) * 0.1
    conv_b = jax.random.normal(k_b, (COUT,), dtype=jnp.float32) * 0.1
    # BatchNorm2d default init: weight (gamma) = 1, bias (beta) = 0
    bn_gamma = jnp.ones((COUT,), dtype=jnp.float32)
    bn_beta = jnp.zeros((COUT,), dtype=jnp.float32)

    ref_bn = _reference_forward(x, conv_w, conv_b, bn_gamma, bn_beta, rescale=True)
    ref_conv = _reference_forward(x, conv_w, conv_b, bn_gamma, bn_beta, rescale=False)

    # f32 operands, explicit multi-band row tiling: tight tolerance.
    out_f32 = layer_wrapper_2d_forward(x, conv_w, conv_b, bn_gamma, bn_beta,
                                       rescale=True, row_tile=8, mxu_bf16=False)
    out_f32 = jax.block_until_ready(out_f32)
    assert out_f32.shape == (N, COUT, H, W)
    assert jnp.allclose(out_f32, ref_bn, atol=1e-4, rtol=1e-4)

    # bf16 MXU operands + bf16 conv intermediate (default), auto row tile.
    # NOTE: the intermediate conv output is bf16-rounded, hence the loose tolerance.
    out_bf16 = layer_wrapper_2d_forward(x, conv_w, conv_b, bn_gamma, bn_beta,
                                        rescale=True, mxu_bf16=True)
    out_bf16 = jax.block_until_ready(out_bf16)
    assert jnp.allclose(out_bf16, ref_bn, atol=3e-2, rtol=3e-2)

    # rescale=False path: BN kernel and BN statistics are skipped entirely.
    out_conv = layer_wrapper_2d_forward(x, conv_w, conv_b, bn_gamma, bn_beta,
                                        rescale=False, row_tile=16, mxu_bf16=False)
    out_conv = jax.block_until_ready(out_conv)
    assert jnp.allclose(out_conv, ref_conv, atol=1e-4, rtol=1e-4)

    print("KERNEL_OK")
</pallas_src>

<mosaic_0001>
module attributes {stable_mosaic.version = 11 : i64} {
  func.func @kernel(%arg0: i32, %arg1: i32, %arg2: memref<1x8x18x4xf32, #tpu.memory_space<vmem>>, %arg3: memref<1x2x18x4xf32, #tpu.memory_space<vmem>>, %arg4: memref<8x36xf32, #tpu.memory_space<vmem>>, %arg5: memref<8x1xf32, #tpu.memory_space<vmem>>, %arg6: memref<1x8x128xf32, #tpu.memory_space<vmem>>, %arg7: memref<1x1x8x2xf32, #tpu.memory_space<vmem>>) attributes {dimension_semantics = [#tpu.dimension_semantics<parallel>, #tpu.dimension_semantics<parallel>], iteration_bounds = array<i64: 2, 2>, scalar_prefetch = 0 : i64, scratch_operands = 0 : i64, tpu.core_type = #tpu.core_type<tc>, window_params = [{transform_indices = @transform_0, window_bounds = array<i64: 1, 8, 18, 4>}, {transform_indices = @transform_1, window_bounds = array<i64: 1, 2, 18, 4>}, {pipeline_mode = #tpu.pipeline_mode<synchronous>, transform_indices = @transform_2, window_bounds = array<i64: 8, 36>}, {pipeline_mode = #tpu.pipeline_mode<synchronous>, transform_indices = @transform_3, window_bounds = array<i64: 8, 1>}, {transform_indices = @transform_4, window_bounds = array<i64: 1, 8, 128>}, {transform_indices = @transform_5, window_bounds = array<i64: 1, 1, 8, 2>}]} {
    %c0 = arith.constant 0 : index
    %c0_0 = arith.constant 0 : index
    %c0_1 = arith.constant 0 : index
    %c0_2 = arith.constant 0 : index
    %0 = vector.load %arg2[%c0, %c0_0, %c0_1, %c0_2] : memref<1x8x18x4xf32, #tpu.memory_space<vmem>>, vector<1x8x18x4xf32>
    %1 = vector.shape_cast %0 : vector<1x8x18x4xf32> to vector<8x18x4xf32>
    %c0_3 = arith.constant 0 : index
    %c0_4 = arith.constant 0 : index
    %c0_5 = arith.constant 0 : index
    %c0_6 = arith.constant 0 : index
    %2 = vector.load %arg3[%c0_3, %c0_4, %c0_5, %c0_6] : memref<1x2x18x4xf32, #tpu.memory_space<vmem>>, vector<1x2x18x4xf32>
    %3 = vector.shape_cast %2 : vector<1x2x18x4xf32> to vector<2x18x4xf32>
    %4 = tpu.concatenate %1, %3 in 0 : vector<8x18x4xf32>, vector<2x18x4xf32> -> vector<10x18x4xf32>
    %5 = vector.extract_strided_slice %4 {offsets = [0, 0, 0], sizes = [8, 16, 4], strides = [1, 1, 1]} : vector<10x18x4xf32> to vector<8x16x4xf32>
    %6 = vector.shape_cast %5 : vector<8x16x4xf32> to vector<128x4xf32>
    %7 = vector.extract_strided_slice %4 {offsets = [0, 1, 0], sizes = [8, 16, 4], strides = [1, 1, 1]} : vector<10x18x4xf32> to vector<8x16x4xf32>
    %8 = vector.shape_cast %7 : vector<8x16x4xf32> to vector<128x4xf32>
    %9 = vector.extract_strided_slice %4 {offsets = [0, 2, 0], sizes = [8, 16, 4], strides = [1, 1, 1]} : vector<10x18x4xf32> to vector<8x16x4xf32>
    %10 = vector.shape_cast %9 : vector<8x16x4xf32> to vector<128x4xf32>
    %11 = vector.extract_strided_slice %4 {offsets = [1, 0, 0], sizes = [8, 16, 4], strides = [1, 1, 1]} : vector<10x18x4xf32> to vector<8x16x4xf32>
    %12 = vector.shape_cast %11 : vector<8x16x4xf32> to vector<128x4xf32>
    %13 = vector.extract_strided_slice %4 {offsets = [1, 1, 0], sizes = [8, 16, 4], strides = [1, 1, 1]} : vector<10x18x4xf32> to vector<8x16x4xf32>
    %14 = vector.shape_cast %13 : vector<8x16x4xf32> to vector<128x4xf32>
    %15 = vector.extract_strided_slice %4 {offsets = [1, 2, 0], sizes = [8, 16, 4], strides = [1, 1, 1]} : vector<10x18x4xf32> to vector<8x16x4xf32>
    %16 = vector.shape_cast %15 : vector<8x16x4xf32> to vector<128x4xf32>
    %17 = vector.extract_strided_slice %4 {offsets = [2, 0, 0], sizes = [8, 16, 4], strides = [1, 1, 1]} : vector<10x18x4xf32> to vector<8x16x4xf32>
    %18 = vector.shape_cast %17 : vector<8x16x4xf32> to vector<128x4xf32>
    %19 = vector.extract_strided_slice %4 {offsets = [2, 1, 0], sizes = [8, 16, 4], strides = [1, 1, 1]} : vector<10x18x4xf32> to vector<8x16x4xf32>
    %20 = vector.shape_cast %19 : vector<8x16x4xf32> to vector<128x4xf32>
    %21 = vector.extract_strided_slice %4 {offsets = [2, 2, 0], sizes = [8, 16, 4], strides = [1, 1, 1]} : vector<10x18x4xf32> to vector<8x16x4xf32>
    %22 = vector.shape_cast %21 : vector<8x16x4xf32> to vector<128x4xf32>
    %23 = tpu.concatenate %6, %8, %10, %12, %14, %16, %18, %20, %22 in 1 : vector<128x4xf32>, vector<128x4xf32>, vector<128x4xf32>, vector<128x4xf32>, vector<128x4xf32>, vector<128x4xf32>, vector<128x4xf32>, vector<128x4xf32>, vector<128x4xf32> -> vector<128x36xf32>
    %c0_7 = arith.constant 0 : index
    %c0_8 = arith.constant 0 : index
    %24 = vector.load %arg4[%c0_7, %c0_8] : memref<8x36xf32, #tpu.memory_space<vmem>>, vector<8x36xf32>
    %cst = arith.constant dense<0.000000e+00> : vector<8x128xf32>
    %25 = tpu.matmul %24, %23, %cst {dimension_numbers = #tpu.dot_dimension_numbers<[1], [1], [0], [0], [0, 0, 1, 0], [], []>} : vector<8x36xf32>, vector<128x36xf32>, vector<8x128xf32> -> vector<8x128xf32>
    %c0_9 = arith.constant 0 : index
    %c0_10 = arith.constant 0 : index
    %26 = vector.load %arg5[%c0_9, %c0_10] : memref<8x1xf32, #tpu.memory_space<vmem>>, vector<8x1xf32>
    %27 = vector.broadcast %26 : vector<8x1xf32> to vector<8x128xf32>
    %28 = arith.addf %25, %27 : vector<8x128xf32>
    %c0_11 = arith.constant 0 : index
    %c0_12 = arith.constant 0 : index
    %c0_13 = arith.constant 0 : index
    %29 = vector.load %arg6[%c0_11, %c0_12, %c0_13] : memref<1x8x128xf32, #tpu.memory_space<vmem>>, vector<1x8x128xf32>
    %30 = vector.shape_cast %29 : vector<1x8x128xf32> to vector<8x128xf32>
    %31 = vector.shape_cast %28 : vector<8x128xf32> to vector<1x8x128xf32>
    tpu.vector_store %arg6[%c0_11, %c0_12, %c0_13], %31 {strides = array<i32>} : memref<1x8x128xf32, #tpu.memory_space<vmem>>, vector<1x8x128xf32>,
    %cst_14 = arith.constant dense<0.000000e+00> : vector<8xf32>
    %32 = vector.multi_reduction <add>, %28, %cst_14 [1] : vector<8x128xf32> to vector<8xf32>
    %33 = vector.shape_cast %32 : vector<8xf32> to vector<8x1xf32>
    %34 = arith.mulf %28, %28 : vector<8x128xf32>
    %cst_15 = arith.constant dense<0.000000e+00> : vector<8xf32>
    %35 = vector.multi_reduction <add>, %34, %cst_15 [1] : vector<8x128xf32> to vector<8xf32>
    %36 = vector.shape_cast %35 : vector<8xf32> to vector<8x1xf32>
    %37 = tpu.concatenate %33, %36 in 1 : vector<8x1xf32>, vector<8x1xf32> -> vector<8x2xf32>
    %c0_16 = arith.constant 0 : index
    %c0_17 = arith.constant 0 : index
    %c0_18 = arith.constant 0 : index
    %c0_19 = arith.constant 0 : index
    %38 = vector.load %arg7[%c0_16, %c0_17, %c0_18, %c0_19] : memref<1x1x8x2xf32, #tpu.memory_space<vmem>>, vector<1x1x8x2xf32>
    %39 = vector.shape_cast %38 : vector<1x1x8x2xf32> to vector<8x2xf32>
    %40 = vector.shape_cast %37 : vector<8x2xf32> to vector<1x1x8x2xf32>
    tpu.vector_store %arg7[%c0_16, %c0_17, %c0_18, %c0_19], %40 {strides = array<i32>} : memref<1x1x8x2xf32, #tpu.memory_space<vmem>>, vector<1x1x8x2xf32>,
    return
  }
  func.func @transform_0(%arg0: i32, %arg1: i32) -> (i32, i32, i32, i32) {
    %c0_i32 = arith.constant 0 : i32
    %c0_i32_0 = arith.constant 0 : i32
    %c0_i32_1 = arith.constant 0 : i32
    return %arg0, %arg1, %c0_i32, %c0_i32_0 : i32, i32, i32, i32
  }
  func.func @transform_1(%arg0: i32, %arg1: i32) -> (i32, i32, i32, i32) {
    %c1_i32 = arith.constant 1 : i32
    %0 = arith.addi %arg1, %c1_i32 : i32
    %c4_i32 = arith.constant 4 : i32
    %1 = arith.muli %0, %c4_i32 : i32
    %c0_i32 = arith.constant 0 : i32
    %c0_i32_0 = arith.constant 0 : i32
    %c0_i32_1 = arith.constant 0 : i32
    return %arg0, %1, %c0_i32, %c0_i32_0 : i32, i32, i32, i32
  }
  func.func @transform_2(%arg0: i32, %arg1: i32) -> (i32, i32) {
    %c0_i32 = arith.constant 0 : i32
    %c0_i32_0 = arith.constant 0 : i32
    %c0_i32_1 = arith.constant 0 : i32
    return %c0_i32, %c0_i32_0 : i32, i32
  }
  func.func @transform_3(%arg0: i32, %arg1: i32) -> (i32, i32) {
    %c0_i32 = arith.constant 0 : i32
    %c0_i32_0 = arith.constant 0 : i32
    %c0_i32_1 = arith.constant 0 : i32
    return %c0_i32, %c0_i32_0 : i32, i32
  }
  func.func @transform_4(%arg0: i32, %arg1: i32) -> (i32, i32, i32) {
    %c0_i32 = arith.constant 0 : i32
    %c0_i32_0 = arith.constant 0 : i32
    return %arg0, %c0_i32, %arg1 : i32, i32, i32
  }
  func.func @transform_5(%arg0: i32, %arg1: i32) -> (i32, i32, i32, i32) {
    %c0_i32 = arith.constant 0 : i32
    %c0_i32_0 = arith.constant 0 : i32
    %c0_i32_1 = arith.constant 0 : i32
    return %arg0, %arg1, %c0_i32, %c0_i32_0 : i32, i32, i32, i32
  }
}

</mosaic_0001>

<llo_original>
// kernel: tpu_custom_call.1
$region0: #{tpu_custom_call.1}
  #allocation0 [shape = 'u32[]', space=smem, size = 0x4, offset = 0x4, fixed_abs, tag = 'smem constant byte address 0x4 - core index']
  #allocation1 [shape = 'u32[144,128]{1,0:T(1,128)}', space=vmem, size = 0x12000, scoped, tag = 'internal scratch']
  %s0 = inlined_call_operand.vmem [shape: f32[2,18,18,4], index: 0, kind: input, shape index: {}]
  %s1 = inlined_call_operand.vmem [shape: f32[2,18,18,4], index: 1, kind: input, shape index: {}]
  %s2 = inlined_call_operand.vmem [shape: f32[8,36], index: 2, kind: input, shape index: {}]
  %s3 = inlined_call_operand.vmem [shape: f32[8,1], index: 3, kind: input, shape index: {}]
  %s4 = inlined_call_operand.hbm [shape: f32[2,8,256], index: 4, kind: output, shape index: {0}]
  %s5 = inlined_call_operand.vmem [shape: f32[2,2,8,2], index: 5, kind: output, shape index: {1}]
  %6 = xla_tuple %s4, %s5
  %s7 = sld [smem:[#allocation0]]
  $region57: #{tpu_custom_call.1} parent=0
    _
  %s9 = ssub.s32 1, %s7
  %s10 = scalar_select 0, %s9, %s7
  $region1: #{tpu_custom_call.1} parent=0
    #allocation2 [shape = 'u8[8192]{0}', space=vmem, size = 0x2000, scoped, tag = 'output window, operand 0']
    #allocation3 [shape = 's32[2]{0}', space=sflag, size = 0x8, scoped, tag = 'scoped memory for tpu_custom_call.1']
    %11 = vsyncpa [#allocation3], 0
    %s12 = scalar_lea.sflag [#allocation3], 1
    %13 = vsyncpa %s12, 0
    loop: start=0, step=1, limit=6
    $region2: #{tpu_custom_call.1} parent=1 // loop_pre_header
      _
    $region3: #{tpu_custom_call.1} parent=1 // loop_header
      %s15 = sphi 0, %s19
      %p16 = scmp.ge.s32.totalorder %s15, 6
      %s22 = sphi 0, %s34
      %s23 = sphi 0, %s30
      %s24 = sphi 0, %s22
      %s25 = sphi 0, %s23
      %s26 = sphi 0, %s24
      %s27 = sphi 0, %s25
      %s39 = sphi 0, %s41
      %s42 = sphi 0, %s39
      %s43 = sphi 0, %s42
      %s59 = sphi 0, %s43
      %s71 = sphi 0, %s73
      %s74 = sphi 0, %s71
      %s75 = sphi 0, %s74
      %s91 = sphi 0, %s75
      %s95 = sphi 0, %s95
      %s97 = sphi 0, %s95
      %s98 = sphi 0, %s97
      %s112 = sphi 0, %s98
      %s116 = sphi 0, %s116
      %s118 = sphi 0, %s116
      %s119 = sphi 0, %s118
      %s133 = sphi 0, %s119
      %s141 = sphi 0, %s143
      %s144 = sphi 0, %s141
      %s145 = sphi 0, %s144
      %s161 = sphi 0, %s145
      %s169 = sphi 0, %s171
      %s172 = sphi 0, %s169
      %s173 = sphi 0, %s172
      %s189 = sphi 0, %s173
    $region4: #{tpu_custom_call.1} parent=1 // loop_header_branch
      %18 = sbr.rel (%p16) target = $region8
    $region5: #{tpu_custom_call.1} parent=1 // loop_body
      %s20 = ssub.s32 %s15, 1
      %s21 = ssub.s32 %s15, 2
      %s28 = sadd.s32 1, %s23
      %p29 = scmp.ge.s32.totalorder %s28, 2
      %s30 = scalar_select %p29, 0, %s28
      %s31 = sadd.s32 1, %s22
      %s32 = scalar_select %p29, %s31, %s22
      %p33 = scmp.ge.s32.totalorder %s32, 2
      %s34 = scalar_select %p33, 0, %s32
      %s35 = ssub.s32 %s22, %s34
      %s36 = ssub.s32 %s23, %s30
      %s37 = sor.u32 %s35, %s36
      %p38 = scmp.eq.s32.totalorder %s37, 0
      %s40 = sadd.s32 %s39, 1
      %s41 = scalar_select %p38, %s39, %s40
      %p44 = pneg %p38
      %p45 = scmp.eq.s32.totalorder %s15, 3
      %p46 = por %p44, %p45
      %p47 = scmp.ne.s32.totalorder %s39, %s42
      %p48 = scmp.eq.s32.totalorder %s15, 0
      %p49 = por %p47, %p48
      %p50 = scmp.ne.s32.totalorder %s39, %s42
      %p51 = scmp.eq.s32.totalorder %s20, 3
      %p52 = por %p50, %p51
      %p53 = scmp.ne.s32.totalorder %s42, %s43
      %p54 = scmp.eq.s32.totalorder %s20, 0
      %p55 = por %p53, %p54
      %p56 = scmp.ne.s32.totalorder %s42, %s43
      %p57 = scmp.eq.s32.totalorder %s21, 3
      %p58 = por %p56, %p57
      %p60 = scmp.ne.s32.totalorder %s43, %s59
      %p61 = scmp.eq.s32.totalorder %s21, 0
      %p62 = por %p60, %p61
      %s63 = sadd.s32 %s23, 1
      %s64 = smul.u32 %s63, 4
      %s65 = sadd.s32 %s30, 1
      %s66 = smul.u32 %s65, 4
      %s67 = ssub.s32 %s22, %s34
      %s68 = ssub.s32 %s64, %s66
      %s69 = sor.u32 %s67, %s68
      %p70 = scmp.eq.s32.totalorder %s69, 0
      %s72 = sadd.s32 %s71, 1
      %s73 = scalar_select %p70, %s71, %s72
      %p76 = pneg %p70
      %p77 = scmp.eq.s32.totalorder %s15, 3
      %p78 = por %p76, %p77
      %p79 = scmp.ne.s32.totalorder %s71, %s74
      %p80 = scmp.eq.s32.totalorder %s15, 0
      %p81 = por %p79, %p80
      %p82 = scmp.ne.s32.totalorder %s71, %s74
      %p83 = scmp.eq.s32.totalorder %s20, 3
      %p84 = por %p82, %p83
      %p85 = scmp.ne.s32.totalorder %s74, %s75
      %p86 = scmp.eq.s32.totalorder %s20, 0
      %p87 = por %p85, %p86
      %p88 = scmp.ne.s32.totalorder %s74, %s75
      %p89 = scmp.eq.s32.totalorder %s21, 3
      %p90 = por %p88, %p89
      %p92 = scmp.ne.s32.totalorder %s75, %s91
      %p93 = scmp.eq.s32.totalorder %s21, 0
      %p94 = por %p92, %p93
      %s96 = sadd.s32 %s95, 1
      %p99 = scmp.eq.s32.totalorder %s15, 3
      %p100 = scmp.ne.s32.totalorder %s95, %s97
      %p101 = scmp.eq.s32.totalorder %s15, 0
      %p102 = por %p100, %p101
      %p103 = scmp.ne.s32.totalorder %s95, %s97
      %p104 = scmp.eq.s32.totalorder %s20, 3
      %p105 = por %p103, %p104
      %p106 = scmp.ne.s32.totalorder %s97, %s98
      %p107 = scmp.eq.s32.totalorder %s20, 0
      %p108 = por %p106, %p107
      %p109 = scmp.ne.s32.totalorder %s97, %s98
      %p110 = scmp.eq.s32.totalorder %s21, 3
      %p111 = por %p109, %p110
      %p113 = scmp.ne.s32.totalorder %s98, %s112
      %p114 = scmp.eq.s32.totalorder %s21, 0
      %p115 = por %p113, %p114
      %s117 = sadd.s32 %s116, 1
      %p120 = scmp.eq.s32.totalorder %s15, 3
      %p121 = scmp.ne.s32.totalorder %s116, %s118
      %p122 = scmp.eq.s32.totalorder %s15, 0
      %p123 = por %p121, %p122
      %p124 = scmp.ne.s32.totalorder %s116, %s118
      %p125 = scmp.eq.s32.totalorder %s20, 3
      %p126 = por %p124, %p125
      %p127 = scmp.ne.s32.totalorder %s118, %s119
      %p128 = scmp.eq.s32.totalorder %s20, 0
      %p129 = por %p127, %p128
      %p130 = scmp.ne.s32.totalorder %s118, %s119
      %p131 = scmp.eq.s32.totalorder %s21, 3
      %p132 = por %p130, %p131
      %p134 = scmp.ne.s32.totalorder %s119, %s133
      %p135 = scmp.eq.s32.totalorder %s21, 0
      %p136 = por %p134, %p135
      %s137 = ssub.s32 %s22, %s34
      %s138 = ssub.s32 %s23, %s30
      %s139 = sor.u32 %s137, %s138
      %p140 = scmp.eq.s32.totalorder %s139, 0
      %s142 = sadd.s32 %s141, 1
      %s143 = scalar_select %p140, %s141, %s142
      %p146 = pneg %p140
      %p147 = scmp.eq.s32.totalorder %s15, 3
      %p148 = por %p146, %p147
      %p149 = scmp.ne.s32.totalorder %s141, %s144
      %p150 = scmp.eq.s32.totalorder %s15, 0
      %p151 = por %p149, %p150
      %p152 = scmp.ne.s32.totalorder %s141, %s144
      %p153 = scmp.eq.s32.totalorder %s20, 3
      %p154 = por %p152, %p153
      %p155 = scmp.ne.s32.totalorder %s144, %s145
      %p156 = scmp.eq.s32.totalorder %s20, 0
      %p157 = por %p155, %p156
      %p158 = scmp.ne.s32.totalorder %s144, %s145
      %p159 = scmp.eq.s32.totalorder %s21, 3
      %p160 = por %p158, %p159
      %p162 = scmp.ne.s32.totalorder %s145, %s161
      %p163 = scmp.eq.s32.totalorder %s21, 0
      %p164 = por %p162, %p163
      %s165 = ssub.s32 %s22, %s34
      %s166 = ssub.s32 %s23, %s30
      %s167 = sor.u32 %s165, %s166
      %p168 = scmp.eq.s32.totalorder %s167, 0
      %s170 = sadd.s32 %s169, 1
      %s171 = scalar_select %p168, %s169, %s170
      %p174 = pneg %p168
      %p175 = scmp.eq.s32.totalorder %s15, 3
      %p176 = por %p174, %p175
      %p177 = scmp.ne.s32.totalorder %s169, %s172
      %p178 = scmp.eq.s32.totalorder %s15, 0
      %p179 = por %p177, %p178
      %p180 = scmp.ne.s32.totalorder %s169, %s172
      %p181 = scmp.eq.s32.totalorder %s20, 3
      %p182 = por %p180, %p181
      %p183 = scmp.ne.s32.totalorder %s172, %s173
      %p184 = scmp.eq.s32.totalorder %s20, 0
      %p185 = por %p183, %p184
      %p186 = scmp.ne.s32.totalorder %s172, %s173
      %p187 = scmp.eq.s32.totalorder %s21, 3
      %p188 = por %p186, %p187
      %p190 = scmp.ne.s32.totalorder %s173, %s189
      %p191 = scmp.eq.s32.totalorder %s21, 0
      %p192 = por %p190, %p191
      %p193 = scmp.le.s32.totalorder 1, %s15
      %p194 = scmp.lt.s32.totalorder %s15, 5
      %p195 = pnand %p193, %p194
      %p196 = pneg %p195
      // Predicated region
      $region9: #{tpu_custom_call.1} parent=5 // pred_check
        _
      $region10: #{tpu_custom_call.1} parent=5 // pred_check_branch
        %198 = sbr.rel (%p195) target = $region12
      $region11: #{tpu_custom_call.1} parent=5 // pred_region
        %s199 = ssub.s32 %s15, 1
        // Predicated region
        $region13: #{tpu_custom_call.1} parent=11 // pred_check
          %p200 = pneg %p108
        $region14: #{tpu_custom_call.1} parent=11 // pred_check_branch
          %202 = sbr.rel (%p200) target = $region16
        $region15: #{tpu_custom_call.1} parent=11 // pred_region
          _
        $region16: #{tpu_custom_call.1} parent=11 // pred_fallthru
          _
        // Predicated region
        $region17: #{tpu_custom_call.1} parent=11 // pred_check
          %p203 = pneg %p129
        $region18: #{tpu_custom_call.1} parent=11 // pred_check_branch
          %205 = sbr.rel (%p203) target = $region20
        $region19: #{tpu_custom_call.1} parent=11 // pred_region
          _
        $region20: #{tpu_custom_call.1} parent=11 // pred_fallthru
          _
      $region12: #{tpu_custom_call.1} parent=5 // pred_fallthru
        _
      %p206 = scmp.lt.s32.totalorder %s15, 4
      // Predicated region
      $region21: #{tpu_custom_call.1} parent=5 // pred_check
        %p207 = pneg %p206
      $region22: #{tpu_custom_call.1} parent=5 // pred_check_branch
        %209 = sbr.rel (%p207) target = $region24
      $region23: #{tpu_custom_call.1} parent=5 // pred_region
        // Predicated region
        $region25: #{tpu_custom_call.1} parent=23 // pred_check
          %p210 = pneg %p49
        $region26: #{tpu_custom_call.1} parent=23 // pred_check_branch
          %212 = sbr.rel (%p210) target = $region28
        $region27: #{tpu_custom_call.1} parent=23 // pred_region
          %s213 = smul.u32 8, %s23
          %s214 = ssub.s32 18, %s213
          %p215 = scmp.lt.s32.totalorder %s214, 8
          %s216 = scalar_select %p215, %s214, 8
          %s217 = smul.u32 128, %s216
          %s218 = smul.u32 %s217, 3
          %p219 = scmp.lt.s32.totalorder %s22, 1
          %s220 = scalar_select %p219, %s22, 1
          %p221 = scmp.lt.s32.totalorder %s213, 17
          %s222 = scalar_select %p221, %s213, 17
          %s223 = smul.addr %s222, 3
          %s224 = smul.addr %s220, 54
          %s225 = sadd.s32 %s223, %s224
          %s226 = smul.addr %s225, 8
          %s227 = scalar_lea.vmem %s0, %s226
          %s228 = smul.u32 8, %s23
          %s229 = ssub.s32 18, %s228
          %p230 = scmp.lt.s32.totalorder %s229, 8
          %s231 = scalar_select %p230, %s229, 8
          %s232 = smul.u32 128, %s231
          %s233 = smul.u32 %s232, 3
        $region28: #{tpu_custom_call.1} parent=23 // pred_fallthru
          _
        // Predicated region
        $region29: #{tpu_custom_call.1} parent=23 // pred_check
          %p234 = pneg %p81
        $region30: #{tpu_custom_call.1} parent=23 // pred_check_branch
          %236 = sbr.rel (%p234) target = $region32
        $region31: #{tpu_custom_call.1} parent=23 // pred_region
          %s237 = sadd.s32 %s23, 1
          %s238 = smul.u32 %s237, 4
          %s239 = smul.u32 2, %s238
          %p240 = scmp.lt.s32.totalorder %s22, 1
          %s241 = scalar_select %p240, %s22, 1
          %p242 = scmp.lt.s32.totalorder %s239, 17
          %s243 = scalar_select %p242, %s239, 17
          %s244 = smul.addr %s243, 3
          %s245 = smul.addr %s241, 54
          %s246 = sadd.s32 %s244, %s245
          %s247 = smul.addr %s246, 8
          %s248 = scalar_lea.vmem %s1, %s247
          %s249 = sadd.s32 %s23, 1
          %s250 = smul.u32 %s249, 4
          %s251 = smul.u32 2, %s250
        $region32: #{tpu_custom_call.1} parent=23 // pred_fallthru
          _
      $region24: #{tpu_custom_call.1} parent=5 // pred_fallthru
        _
      %p252 = scmp.le.s32.totalorder 1, %s15
      %p253 = scmp.lt.s32.totalorder %s15, 5
      %p254 = pnand %p252, %p253
      %p255 = pneg %p254
      // Predicated region
      $region33: #{tpu_custom_call.1} parent=5 // pred_check
        _
      $region34: #{tpu_custom_call.1} parent=5 // pred_check_branch
        %257 = sbr.rel (%p254) target = $region36
      $region35: #{tpu_custom_call.1} parent=5 // pred_region
        %s258 = ssub.s32 %s15, 1
        %s259 = smul.u32 8, %s25
        %s260 = ssub.s32 18, %s259
        %p261 = scmp.lt.s32.totalorder %s260, 8
        %s262 = scalar_select %p261, %s260, 8
        %s263 = smul.u32 128, %s262
        %s264 = smul.u32 %s263, 3
        %p265 = scmp.lt.s32.totalorder %s24, 1
        %s266 = scalar_select %p265, %s24, 1
        %p267 = scmp.lt.s32.totalorder %s259, 17
        %s268 = scalar_select %p267, %s259, 17
        %s269 = smul.addr %s268, 3
        %s270 = smul.addr %s266, 54
        %s271 = sadd.s32 %s269, %s270
        %s272 = smul.addr %s271, 8
        %s273 = scalar_lea.vmem %s0, %s272
        %p274 = pneg %p55
        %p275 = pneg %p52
        %s276 = sadd.s32 %s25, 1
        %s277 = smul.u32 %s276, 4
        %s278 = smul.u32 2, %s277
        %p279 = scmp.lt.s32.totalorder %s24, 1
        %s280 = scalar_select %p279, %s24, 1
        %p281 = scmp.lt.s32.totalorder %s278, 17
        %s282 = scalar_select %p281, %s278, 17
        %s283 = smul.addr %s282, 3
        %s284 = smul.addr %s280, 54
        %s285 = sadd.s32 %s283, %s284
        %s286 = smul.addr %s285, 8
        %s287 = scalar_lea.vmem %s1, %s286
        %p288 = pneg %p87
        %p289 = pneg %p84
        %p290 = pneg %p108
        %p291 = pneg %p105
        %p292 = pneg %p129
        %p293 = pneg %p126
        %p294 = pneg %p157
        %p295 = pneg %p154
        %s296 = sand.u32 %s144, 1
        %s297 = scalar_lea.sflag [#allocation3], %s296
        %s298 = sand.u32 %s144, 1
        %s299 = smul.addr %s298, 8
        %s300 = scalar_lea.vmem [#allocation2], %s299
        %p301 = pneg %p185
        %p302 = pneg %p182
        %p303 = scmp.lt.s32.totalorder %s24, 1
        %s304 = scalar_select %p303, %s24, 1
        %p305 = scmp.lt.s32.totalorder %s25, 1
        %s306 = scalar_select %p305, %s25, 1
        %s307 = smul.addr %s304, 2
        %s308 = sadd.s32 %s306, %s307
        %s309 = smul.addr %s308, 8
        %s310 = scalar_lea.vmem %s5, %s309
        %s311 = smul.u32 8, %s25
        %s312 = ssub.s32 18, %s311
        %p313 = scmp.lt.s32.totalorder %s312, 8
        %s314 = scalar_select %p313, %s312, 8
        %s315 = smul.u32 128, %s314
        %s316 = smul.u32 %s315, 3
        %p317 = scmp.lt.s32.totalorder %s24, 1
        %s318 = scalar_select %p317, %s24, 1
        %p319 = scmp.lt.s32.totalorder %s311, 17
        %s320 = scalar_select %p319, %s311, 17
        %s321 = smul.addr %s320, 3
        %s322 = smul.addr %s318, 54
        %s323 = sadd.s32 %s321, %s322
        %s324 = smul.addr %s323, 8
        %s325 = scalar_lea.vmem %s0, %s324
        %s326 = smul.u32 8, %s25
        %s327 = ssub.s32 18, %s326
        %p328 = scmp.lt.s32.totalorder %s327, 8
        %s329 = scalar_select %p328, %s327, 8
        %s330 = smul.u32 128, %s329
        %s331 = smul.u32 %s330, 3
        %s332 = sadd.s32 %s25, 1
        %s333 = smul.u32 %s332, 4
        %s334 = smul.u32 2, %s333
        %p335 = scmp.lt.s32.totalorder %s24, 1
        %s336 = scalar_select %p335, %s24, 1
        %p337 = scmp.lt.s32.totalorder %s334, 17
        %s338 = scalar_select %p337, %s334, 17
        %s339 = smul.addr %s338, 3
        %s340 = smul.addr %s336, 54
        %s341 = sadd.s32 %s339, %s340
        %s342 = smul.addr %s341, 8
        %s343 = scalar_lea.vmem %s1, %s342
        %s344 = sadd.s32 %s25, 1
        %s345 = smul.u32 %s344, 4
        %s346 = smul.u32 2, %s345
        %p347 = scmp.lt.s32.totalorder %s24, 1
        %s348 = scalar_select %p347, %s24, 1
        %p349 = scmp.lt.s32.totalorder %s25, 1
        %s350 = scalar_select %p349, %s25, 1
        %s351 = smul.addr %s348, 2
        %s352 = sadd.s32 %s350, %s351
        %s353 = smul.addr %s352, 8
        %s354 = scalar_lea.vmem %s5, %s353
        %v355 = vld [vmem:[%s325] sm:$0xff]
        %v356 = vld [vmem:[%s325 + $0x8] sm:$0xff]
        %v357 = vld [vmem:[%s325 + $0x10] sm:$0x3]
        %v358 = vld [vmem:[%s325 + $0x18] sm:$0xff]
        %v359 = vld [vmem:[%s325 + $0x20] sm:$0xff]
        %v360 = vld [vmem:[%s325 + $0x28] sm:$0x3]
        %v361 = vld [vmem:[%s325 + $0x30] sm:$0xff]
        %v362 = vld [vmem:[%s325 + $0x38] sm:$0xff]
        %v363 = vld [vmem:[%s325 + $0x40] sm:$0x3]
        %v364 = vld [vmem:[%s325 + $0x48] sm:$0xff]
        %v365 = vld [vmem:[%s325 + $0x50] sm:$0xff]
        %v366 = vld [vmem:[%s325 + $0x58] sm:$0x3]
        %v367 = vld [vmem:[%s325 + $0x60] sm:$0xff]
        %v368 = vld [vmem:[%s325 + $0x68] sm:$0xff]
        %v369 = vld [vmem:[%s325 + $0x70] sm:$0x3]
        %v370 = vld [vmem:[%s325 + $0x78] sm:$0xff]
        %v371 = vld [vmem:[%s325 + $0x80] sm:$0xff]
        %v372 = vld [vmem:[%s325 + $0x88] sm:$0x3]
        %v373 = vld [vmem:[%s325 + $0x90] sm:$0xff]
        %v374 = vld [vmem:[%s325 + $0x98] sm:$0xff]
        %v375 = vld [vmem:[%s325 + $0xa0] sm:$0x3]
        %v376 = vld [vmem:[%s325 + $0xa8] sm:$0xff]
        %v377 = vld [vmem:[%s325 + $0xb0] sm:$0xff]
        %v378 = vld [vmem:[%s325 + $0xb8] sm:$0x3]
        %v379 = vld [vmem:[%s343] sm:$0xff]
        %v380 = vld [vmem:[%s343 + $0x8] sm:$0xff]
        %v381 = vld [vmem:[%s343 + $0x10] sm:$0x3]
        %v382 = vld [vmem:[%s343 + $0x18] sm:$0xff]
        %v383 = vld [vmem:[%s343 + $0x20] sm:$0xff]
        %v384 = vld [vmem:[%s343 + $0x28] sm:$0x3]
        %vm409 = vcmask 1046528
        %v410 = vrot.slane %v355, 1
        %v411 = vrot.slane %v356, 1
        %v412 = vsel %vm409, %v410, %v411
        %v413 = vrot.slane %v357, 1
        %v414 = vsel %vm409, %v411, %v413
        %v415 = vrot.slane %v358, 1
        %v416 = vrot.slane %v359, 1
        %v417 = vsel %vm409, %v415, %v416
        %v418 = vrot.slane %v360, 1
        %v419 = vsel %vm409, %v416, %v418
        %v420 = vrot.slane %v361, 1
        %v421 = vrot.slane %v362, 1
        %v422 = vsel %vm409, %v420, %v421
        %v423 = vrot.slane %v363, 1
        %v424 = vsel %vm409, %v421, %v423
        %v425 = vrot.slane %v364, 1
        %v426 = vrot.slane %v365, 1
        %v427 = vsel %vm409, %v425, %v426
        %v428 = vrot.slane %v366, 1
        %v429 = vsel %vm409, %v426, %v428
        %v430 = vrot.slane %v367, 1
        %v431 = vrot.slane %v368, 1
        %v432 = vsel %vm409, %v430, %v431
        %v433 = vrot.slane %v369, 1
        %v434 = vsel %vm409, %v431, %v433
        %v435 = vrot.slane %v370, 1
        %v436 = vrot.slane %v371, 1
        %v437 = vsel %vm409, %v435, %v436
        %v438 = vrot.slane %v372, 1
        %v439 = vsel %vm409, %v436, %v438
        %v440 = vrot.slane %v373, 1
        %v441 = vrot.slane %v374, 1
        %v442 = vsel %vm409, %v440, %v441
        %v443 = vrot.slane %v375, 1
        %v444 = vsel %vm409, %v441, %v443
        %v445 = vrot.slane %v376, 1
        %v446 = vrot.slane %v377, 1
        %v447 = vsel %vm409, %v445, %v446
        %v448 = vrot.slane %v378, 1
        %v449 = vsel %vm409, %v446, %v448
        %vm450 = vcmask 1045504
        %v451 = vrot.slane %v355, 2
        %v452 = vrot.slane %v356, 2
        %v453 = vsel %vm450, %v451, %v452
        %v454 = vrot.slane %v357, 2
        %v455 = vsel %vm450, %v452, %v454
        %v456 = vrot.slane %v358, 2
        %v457 = vrot.slane %v359, 2
        %v458 = vsel %vm450, %v456, %v457
        %v459 = vrot.slane %v360, 2
        %v460 = vsel %vm450, %v457, %v459
        %v461 = vrot.slane %v361, 2
        %v462 = vrot.slane %v362, 2
        %v463 = vsel %vm450, %v461, %v462
        %v464 = vrot.slane %v363, 2
        %v465 = vsel %vm450, %v462, %v464
        %v466 = vrot.slane %v364, 2
        %v467 = vrot.slane %v365, 2
        %v468 = vsel %vm450, %v466, %v467
        %v469 = vrot.slane %v366, 2
        %v470 = vsel %vm450, %v467, %v469
        %v471 = vrot.slane %v367, 2
        %v472 = vrot.slane %v368, 2
        %v473 = vsel %vm450, %v471, %v472
        %v474 = vrot.slane %v369, 2
        %v475 = vsel %vm450, %v472, %v474
        %v476 = vrot.slane %v370, 2
        %v477 = vrot.slane %v371, 2
        %v478 = vsel %vm450, %v476, %v477
        %v479 = vrot.slane %v372, 2
        %v480 = vsel %vm450, %v477, %v479
        %v481 = vrot.slane %v373, 2
        %v482 = vrot.slane %v374, 2
        %v483 = vsel %vm450, %v481, %v482
        %v484 = vrot.slane %v375, 2
        %v485 = vsel %vm450, %v482, %v484
        %v486 = vrot.slane %v376, 2
        %v487 = vrot.slane %v377, 2
        %v488 = vsel %vm450, %v486, %v487
        %v489 = vrot.slane %v378, 2
        %v490 = vsel %vm450, %v487, %v489
        %v494 = vrot.slane %v379, 1
        %v495 = vrot.slane %v380, 1
        %v496 = vsel %vm409, %v494, %v495
        %v497 = vrot.slane %v381, 1
        %v498 = vsel %vm409, %v495, %v497
        %v499 = vrot.slane %v379, 2
        %v500 = vrot.slane %v380, 2
        %v501 = vsel %vm450, %v499, %v500
        %v502 = vrot.slane %v381, 2
        %v503 = vsel %vm450, %v500, %v502
        %v507 = vrot.slane %v382, 1
        %v508 = vrot.slane %v383, 1
        %v509 = vsel %vm409, %v507, %v508
        %v510 = vrot.slane %v384, 1
        %v511 = vsel %vm409, %v508, %v510
        %v512 = vrot.slane %v382, 2
        %v513 = vrot.slane %v383, 2
        %v514 = vsel %vm450, %v512, %v513
        %v515 = vrot.slane %v384, 2
        %v516 = vsel %vm450, %v513, %v515
        %517 = vrot.lane.b32.xlu0 %v412, 4
        %v518 = vpop.permute.xlu0 %517
        %519 = vrot.lane.b32.xlu0 %v414, 4
        %v520 = vpop.permute.xlu0 %519
        %521 = vrot.lane.b32.xlu0 %v417, 4
        %v522 = vpop.permute.xlu0 %521
        %523 = vrot.lane.b32.xlu0 %v419, 4
        %v524 = vpop.permute.xlu0 %523
        %525 = vrot.lane.b32.xlu0 %v422, 4
        %v526 = vpop.permute.xlu0 %525
        %527 = vrot.lane.b32.xlu0 %v424, 4
        %v528 = vpop.permute.xlu0 %527
        %529 = vrot.lane.b32.xlu0 %v427, 4
        %v530 = vpop.permute.xlu0 %529
        %531 = vrot.lane.b32.xlu0 %v429, 4
        %v532 = vpop.permute.xlu0 %531
        %533 = vrot.lane.b32.xlu0 %v432, 4
        %v534 = vpop.permute.xlu0 %533
        %535 = vrot.lane.b32.xlu0 %v434, 4
        %v536 = vpop.permute.xlu0 %535
        %537 = vrot.lane.b32.xlu0 %v437, 4
        %v538 = vpop.permute.xlu0 %537
        %539 = vrot.lane.b32.xlu0 %v439, 4
        %v540 = vpop.permute.xlu0 %539
        %541 = vrot.lane.b32.xlu0 %v442, 4
        %v542 = vpop.permute.xlu0 %541
        %543 = vrot.lane.b32.xlu0 %v444, 4
        %v544 = vpop.permute.xlu0 %543
        %545 = vrot.lane.b32.xlu0 %v447, 4
        %v546 = vpop.permute.xlu0 %545
        %547 = vrot.lane.b32.xlu0 %v449, 4
        %v548 = vpop.permute.xlu0 %547
        %565 = vrot.lane.b32.xlu0 %v453, 8
        %v566 = vpop.permute.xlu0 %565
        %567 = vrot.lane.b32.xlu0 %v455, 8
        %v568 = vpop.permute.xlu0 %567
        %569 = vrot.lane.b32.xlu0 %v458, 8
        %v570 = vpop.permute.xlu0 %569
        %571 = vrot.lane.b32.xlu0 %v460, 8
        %v572 = vpop.permute.xlu0 %571
        %573 = vrot.lane.b32.xlu0 %v463, 8
        %v574 = vpop.permute.xlu0 %573
        %575 = vrot.lane.b32.xlu0 %v465, 8
        %v576 = vpop.permute.xlu0 %575
        %577 = vrot.lane.b32.xlu0 %v468, 8
        %v578 = vpop.permute.xlu0 %577
        %579 = vrot.lane.b32.xlu0 %v470, 8
        %v580 = vpop.permute.xlu0 %579
        %581 = vrot.lane.b32.xlu0 %v473, 8
        %v582 = vpop.permute.xlu0 %581
        %583 = vrot.lane.b32.xlu0 %v475, 8
        %v584 = vpop.permute.xlu0 %583
        %585 = vrot.lane.b32.xlu0 %v478, 8
        %v586 = vpop.permute.xlu0 %585
        %587 = vrot.lane.b32.xlu0 %v480, 8
        %v588 = vpop.permute.xlu0 %587
        %589 = vrot.lane.b32.xlu0 %v483, 8
        %v590 = vpop.permute.xlu0 %589
        %591 = vrot.lane.b32.xlu0 %v485, 8
        %v592 = vpop.permute.xlu0 %591
        %593 = vrot.lane.b32.xlu0 %v488, 8
        %v594 = vpop.permute.xlu0 %593
        %595 = vrot.lane.b32.xlu0 %v490, 8
        %v596 = vpop.permute.xlu0 %595
        %613 = vrot.lane.b32.xlu0 %v358, 12
        %v614 = vpop.permute.xlu0 %613
        %615 = vrot.lane.b32.xlu0 %v359, 12
        %v616 = vpop.permute.xlu0 %615
        %617 = vrot.lane.b32.xlu0 %v361, 12
        %v618 = vpop.permute.xlu0 %617
        %619 = vrot.lane.b32.xlu0 %v362, 12
        %v620 = vpop.permute.xlu0 %619
        %621 = vrot.lane.b32.xlu0 %v364, 12
        %v622 = vpop.permute.xlu0 %621
        %623 = vrot.lane.b32.xlu0 %v365, 12
        %v624 = vpop.permute.xlu0 %623
        %625 = vrot.lane.b32.xlu0 %v367, 12
        %v626 = vpop.permute.xlu0 %625
        %627 = vrot.lane.b32.xlu0 %v368, 12
        %v628 = vpop.permute.xlu0 %627
        %629 = vrot.lane.b32.xlu0 %v370, 12
        %v630 = vpop.permute.xlu0 %629
        %631 = vrot.lane.b32.xlu0 %v371, 12
        %v632 = vpop.permute.xlu0 %631
        %633 = vrot.lane.b32.xlu0 %v373, 12
        %v634 = vpop.permute.xlu0 %633
        %635 = vrot.lane.b32.xlu0 %v374, 12
        %v636 = vpop.permute.xlu0 %635
        %637 = vrot.lane.b32.xlu0 %v376, 12
        %v638 = vpop.permute.xlu0 %637
        %639 = vrot.lane.b32.xlu0 %v377, 12
        %v640 = vpop.permute.xlu0 %639
        %641 = vrot.lane.b32.xlu0 %v379, 12
        %v642 = vpop.permute.xlu0 %641
        %643 = vrot.lane.b32.xlu0 %v380, 12
        %v644 = vpop.permute.xlu0 %643
        %661 = vrot.lane.b32.xlu0 %v417, 16
        %v662 = vpop.permute.xlu0 %661
        %663 = vrot.lane.b32.xlu0 %v419, 16
        %v664 = vpop.permute.xlu0 %663
        %665 = vrot.lane.b32.xlu0 %v422, 16
        %v666 = vpop.permute.xlu0 %665
        %667 = vrot.lane.b32.xlu0 %v424, 16
        %v668 = vpop.permute.xlu0 %667
        %669 = vrot.lane.b32.xlu0 %v427, 16
        %v670 = vpop.permute.xlu0 %669
        %671 = vrot.lane.b32.xlu0 %v429, 16
        %v672 = vpop.permute.xlu0 %671
        %673 = vrot.lane.b32.xlu0 %v432, 16
        %v674 = vpop.permute.xlu0 %673
        %675 = vrot.lane.b32.xlu0 %v434, 16
        %v676 = vpop.permute.xlu0 %675
        %677 = vrot.lane.b32.xlu0 %v437, 16
        %v678 = vpop.permute.xlu0 %677
        %679 = vrot.lane.b32.xlu0 %v439, 16
        %v680 = vpop.permute.xlu0 %679
        %681 = vrot.lane.b32.xlu0 %v442, 16
        %v682 = vpop.permute.xlu0 %681
        %683 = vrot.lane.b32.xlu0 %v444, 16
        %v684 = vpop.permute.xlu0 %683
        %685 = vrot.lane.b32.xlu0 %v447, 16
        %v686 = vpop.permute.xlu0 %685
        %687 = vrot.lane.b32.xlu0 %v449, 16
        %v688 = vpop.permute.xlu0 %687
        %689 = vrot.lane.b32.xlu0 %v496, 16
        %v690 = vpop.permute.xlu0 %689
        %691 = vrot.lane.b32.xlu0 %v498, 16
        %v692 = vpop.permute.xlu0 %691
        %709 = vrot.lane.b32.xlu0 %v458, 20
        %v710 = vpop.permute.xlu0 %709
        %711 = vrot.lane.b32.xlu0 %v460, 20
        %v712 = vpop.permute.xlu0 %711
        %713 = vrot.lane.b32.xlu0 %v463, 20
        %v714 = vpop.permute.xlu0 %713
        %715 = vrot.lane.b32.xlu0 %v465, 20
        %v716 = vpop.permute.xlu0 %715
        %717 = vrot.lane.b32.xlu0 %v468, 20
        %v718 = vpop.permute.xlu0 %717
        %719 = vrot.lane.b32.xlu0 %v470, 20
        %v720 = vpop.permute.xlu0 %719
        %721 = vrot.lane.b32.xlu0 %v473, 20
        %v722 = vpop.permute.xlu0 %721
        %723 = vrot.lane.b32.xlu0 %v475, 20
        %v724 = vpop.permute.xlu0 %723
        %725 = vrot.lane.b32.xlu0 %v478, 20
        %v726 = vpop.permute.xlu0 %725
        %727 = vrot.lane.b32.xlu0 %v480, 20
        %v728 = vpop.permute.xlu0 %727
        %729 = vrot.lane.b32.xlu0 %v483, 20
        %v730 = vpop.permute.xlu0 %729
        %731 = vrot.lane.b32.xlu0 %v485, 20
        %v732 = vpop.permute.xlu0 %731
        %733 = vrot.lane.b32.xlu0 %v488, 20
        %v734 = vpop.permute.xlu0 %733
        %735 = vrot.lane.b32.xlu0 %v490, 20
        %v736 = vpop.permute.xlu0 %735
        %737 = vrot.lane.b32.xlu0 %v501, 20
        %v738 = vpop.permute.xlu0 %737
        %739 = vrot.lane.b32.xlu0 %v503, 20
        %v740 = vpop.permute.xlu0 %739
        %757 = vrot.lane.b32.xlu0 %v361, 24
        %v758 = vpop.permute.xlu0 %757
        %759 = vrot.lane.b32.xlu0 %v362, 24
        %v760 = vpop.permute.xlu0 %759
        %761 = vrot.lane.b32.xlu0 %v364, 24
        %v762 = vpop.permute.xlu0 %761
        %763 = vrot.lane.b32.xlu0 %v365, 24
        %v764 = vpop.permute.xlu0 %763
        %765 = vrot.lane.b32.xlu0 %v367, 24
        %v766 = vpop.permute.xlu0 %765
        %767 = vrot.lane.b32.xlu0 %v368, 24
        %v768 = vpop.permute.xlu0 %767
        %769 = vrot.lane.b32.xlu0 %v370, 24
        %v770 = vpop.permute.xlu0 %769
        %771 = vrot.lane.b32.xlu0 %v371, 24
        %v772 = vpop.permute.xlu0 %771
        %773 = vrot.lane.b32.xlu0 %v373, 24
        %v774 = vpop.permute.xlu0 %773
        %775 = vrot.lane.b32.xlu0 %v374, 24
        %v776 = vpop.permute.xlu0 %775
        %777 = vrot.lane.b32.xlu0 %v376, 24
        %v778 = vpop.permute.xlu0 %777
        %779 = vrot.lane.b32.xlu0 %v377, 24
        %v780 = vpop.permute.xlu0 %779
        %781 = vrot.lane.b32.xlu0 %v379, 24
        %v782 = vpop.permute.xlu0 %781
        %783 = vrot.lane.b32.xlu0 %v380, 24
        %v784 = vpop.permute.xlu0 %783
        %785 = vrot.lane.b32.xlu0 %v382, 24
        %v786 = vpop.permute.xlu0 %785
        %787 = vrot.lane.b32.xlu0 %v383, 24
        %v788 = vpop.permute.xlu0 %787
        %805 = vrot.lane.b32.xlu0 %v422, 28
        %v806 = vpop.permute.xlu0 %805
        %807 = vrot.lane.b32.xlu0 %v424, 28
        %v808 = vpop.permute.xlu0 %807
        %809 = vrot.lane.b32.xlu0 %v427, 28
        %v810 = vpop.permute.xlu0 %809
        %811 = vrot.lane.b32.xlu0 %v429, 28
        %v812 = vpop.permute.xlu0 %811
        %813 = vrot.lane.b32.xlu0 %v432, 28
        %v814 = vpop.permute.xlu0 %813
        %815 = vrot.lane.b32.xlu0 %v434, 28
        %v816 = vpop.permute.xlu0 %815
        %817 = vrot.lane.b32.xlu0 %v437, 28
        %v818 = vpop.permute.xlu0 %817
        %819 = vrot.lane.b32.xlu0 %v439, 28
        %v820 = vpop.permute.xlu0 %819
        %821 = vrot.lane.b32.xlu0 %v442, 28
        %v822 = vpop.permute.xlu0 %821
        %823 = vrot.lane.b32.xlu0 %v444, 28
        %v824 = vpop.permute.xlu0 %823
        %825 = vrot.lane.b32.xlu0 %v447, 28
        %v826 = vpop.permute.xlu0 %825
        %827 = vrot.lane.b32.xlu0 %v449, 28
        %v828 = vpop.permute.xlu0 %827
        %829 = vrot.lane.b32.xlu0 %v496, 28
        %v830 = vpop.permute.xlu0 %829
        %831 = vrot.lane.b32.xlu0 %v498, 28
        %v832 = vpop.permute.xlu0 %831
        %833 = vrot.lane.b32.xlu0 %v509, 28
        %v834 = vpop.permute.xlu0 %833
        %835 = vrot.lane.b32.xlu0 %v511, 28
        %v836 = vpop.permute.xlu0 %835
        %853 = vrot.lane.b32.xlu0 %v463, 32
        %v854 = vpop.permute.xlu0 %853
        %855 = vrot.lane.b32.xlu0 %v465, 32
        %v856 = vpop.permute.xlu0 %855
        %857 = vrot.lane.b32.xlu0 %v468, 32
        %v858 = vpop.permute.xlu0 %857
        %859 = vrot.lane.b32.xlu0 %v470, 32
        %v860 = vpop.permute.xlu0 %859
        %861 = vrot.lane.b32.xlu0 %v473, 32
        %v862 = vpop.permute.xlu0 %861
        %863 = vrot.lane.b32.xlu0 %v475, 32
        %v864 = vpop.permute.xlu0 %863
        %865 = vrot.lane.b32.xlu0 %v478, 32
        %v866 = vpop.permute.xlu0 %865
        %867 = vrot.lane.b32.xlu0 %v480, 32
        %v868 = vpop.permute.xlu0 %867
        %869 = vrot.lane.b32.xlu0 %v483, 32
        %v870 = vpop.permute.xlu0 %869
        %871 = vrot.lane.b32.xlu0 %v485, 32
        %v872 = vpop.permute.xlu0 %871
        %873 = vrot.lane.b32.xlu0 %v488, 32
        %v874 = vpop.permute.xlu0 %873
        %875 = vrot.lane.b32.xlu0 %v490, 32
        %v876 = vpop.permute.xlu0 %875
        %877 = vrot.lane.b32.xlu0 %v501, 32
        %v878 = vpop.permute.xlu0 %877
        %879 = vrot.lane.b32.xlu0 %v503, 32
        %v880 = vpop.permute.xlu0 %879
        %881 = vrot.lane.b32.xlu0 %v514, 32
        %v882 = vpop.permute.xlu0 %881
        %883 = vrot.lane.b32.xlu0 %v516, 32
        %v884 = vpop.permute.xlu0 %883
        %vm901 = vcmask 31744
        %v902 = vsel %vm901, %v355, %v518
        %v903 = vsel %vm901, %v356, %v520
        %v904 = vsel %vm901, %v358, %v522
        %v905 = vsel %vm901, %v359, %v524
        %v906 = vsel %vm901, %v361, %v526
        %v907 = vsel %vm901, %v362, %v528
        %v908 = vsel %vm901, %v364, %v530
        %v909 = vsel %vm901, %v365, %v532
        %v910 = vsel %vm901, %v367, %v534
        %v911 = vsel %vm901, %v368, %v536
        %v912 = vsel %vm901, %v370, %v538
        %v913 = vsel %vm901, %v371, %v540
        %v914 = vsel %vm901, %v373, %v542
        %v915 = vsel %vm901, %v374, %v544
        %v916 = vsel %vm901, %v376, %v546
        %v917 = vsel %vm901, %v377, %v548
        %vm918 = vcmask 64512
        %v919 = vsel %vm918, %v902, %v566
        %v920 = vsel %vm918, %v903, %v568
        %v921 = vsel %vm918, %v904, %v570
        %v922 = vsel %vm918, %v905, %v572
        %v923 = vsel %vm918, %v906, %v574
        %v924 = vsel %vm918, %v907, %v576
        %v925 = vsel %vm918, %v908, %v578
        %v926 = vsel %vm918, %v909, %v580
        %v927 = vsel %vm918, %v910, %v582
        %v928 = vsel %vm918, %v911, %v584
        %v929 = vsel %vm918, %v912, %v586
        %v930 = vsel %vm918, %v913, %v588
        %v931 = vsel %vm918, %v914, %v590
        %v932 = vsel %vm918, %v915, %v592
        %v933 = vsel %vm918, %v916, %v594
        %v934 = vsel %vm918, %v917, %v596
        %vm935 = vcmask 97280
        %v936 = vsel %vm935, %v919, %v614
        %v937 = vsel %vm935, %v920, %v616
        %v938 = vsel %vm935, %v921, %v618
        %v939 = vsel %vm935, %v922, %v620
        %v940 = vsel %vm935, %v923, %v622
        %v941 = vsel %vm935, %v924, %v624
        %v942 = vsel %vm935, %v925, %v626
        %v943 = vsel %vm935, %v926, %v628
        %v944 = vsel %vm935, %v927, %v630
        %v945 = vsel %vm935, %v928, %v632
        %v946 = vsel %vm935, %v929, %v634
        %v947 = vsel %vm935, %v930, %v636
        %v948 = vsel %vm935, %v931, %v638
        %v949 = vsel %vm935, %v932, %v640
        %v950 = vsel %vm935, %v933, %v642
        %v951 = vsel %vm935, %v934, %v644
        %vm952 = vcmask 130048
        %v953 = vsel %vm952, %v936, %v662
        %v954 = vsel %vm952, %v937, %v664
        %v955 = vsel %vm952, %v938, %v666
        %v956 = vsel %vm952, %v939, %v668
        %v957 = vsel %vm952, %v940, %v670
        %v958 = vsel %vm952, %v941, %v672
        %v959 = vsel %vm952, %v942, %v674
        %v960 = vsel %vm952, %v943, %v676
        %v961 = vsel %vm952, %v944, %v678
        %v962 = vsel %vm952, %v945, %v680
        %v963 = vsel %vm952, %v946, %v682
        %v964 = vsel %vm952, %v947, %v684
        %v965 = vsel %vm952, %v948, %v686
        %v966 = vsel %vm952, %v949, %v688
        %v967 = vsel %vm952, %v950, %v690
        %v968 = vsel %vm952, %v951, %v692
        %vm969 = vcmask 162816
        %v970 = vsel %vm969, %v953, %v710
        %v971 = vsel %vm969, %v954, %v712
        %v972 = vsel %vm969, %v955, %v714
        %v973 = vsel %vm969, %v956, %v716
        %v974 = vsel %vm969, %v957, %v718
        %v975 = vsel %vm969, %v958, %v720
        %v976 = vsel %vm969, %v959, %v722
        %v977 = vsel %vm969, %v960, %v724
        %v978 = vsel %vm969, %v961, %v726
        %v979 = vsel %vm969, %v962, %v728
        %v980 = vsel %vm969, %v963, %v730
        %v981 = vsel %vm969, %v964, %v732
        %v982 = vsel %vm969, %v965, %v734
        %v983 = vsel %vm969, %v966, %v736
        %v984 = vsel %vm969, %v967, %v738
        %v985 = vsel %vm969, %v968, %v740
        %vm986 = vcmask 195584
        %v987 = vsel %vm986, %v970, %v758
        %v988 = vsel %vm986, %v971, %v760
        %v989 = vsel %vm986, %v972, %v762
        %v990 = vsel %vm986, %v973, %v764
        %v991 = vsel %vm986, %v974, %v766
        %v992 = vsel %vm986, %v975, %v768
        %v993 = vsel %vm986, %v976, %v770
        %v994 = vsel %vm986, %v977, %v772
        %v995 = vsel %vm986, %v978, %v774
        %v996 = vsel %vm986, %v979, %v776
        %v997 = vsel %vm986, %v980, %v778
        %v998 = vsel %vm986, %v981, %v780
        %v999 = vsel %vm986, %v982, %v782
        %v1000 = vsel %vm986, %v983, %v784
        %v1001 = vsel %vm986, %v984, %v786
        %v1002 = vsel %vm986, %v985, %v788
        %vm1003 = vcmask 228352
        %v1004 = vsel %vm1003, %v987, %v806
        %v1005 = vsel %vm1003, %v988, %v808
        %v1006 = vsel %vm1003, %v989, %v810
        %v1007 = vsel %vm1003, %v990, %v812
        %v1008 = vsel %vm1003, %v991, %v814
        %v1009 = vsel %vm1003, %v992, %v816
        %v1010 = vsel %vm1003, %v993, %v818
        %v1011 = vsel %vm1003, %v994, %v820
        %v1012 = vsel %vm1003, %v995, %v822
        %v1013 = vsel %vm1003, %v996, %v824
        %v1014 = vsel %vm1003, %v997, %v826
        %v1015 = vsel %vm1003, %v998, %v828
        %v1016 = vsel %vm1003, %v999, %v830
        %v1017 = vsel %vm1003, %v1000, %v832
        %v1018 = vsel %vm1003, %v1001, %v834
        %v1019 = vsel %vm1003, %v1002, %v836
        %vm1020 = vcmask 261120
        %v1021 = vsel %vm1020, %v1004, %v854
        %v1022 = vsel %vm1020, %v1005, %v856
        %v1023 = vsel %vm1020, %v1006, %v858
        %v1024 = vsel %vm1020, %v1007, %v860
        %v1025 = vsel %vm1020, %v1008, %v862
        %v1026 = vsel %vm1020, %v1009, %v864
        %v1027 = vsel %vm1020, %v1010, %v866
        %v1028 = vsel %vm1020, %v1011, %v868
        %v1029 = vsel %vm1020, %v1012, %v870
        %v1030 = vsel %vm1020, %v1013, %v872
        %v1031 = vsel %vm1020, %v1014, %v874
        %v1032 = vsel %vm1020, %v1015, %v876
        %v1033 = vsel %vm1020, %v1016, %v878
        %v1034 = vsel %vm1020, %v1017, %v880
        %v1035 = vsel %vm1020, %v1018, %v882
        %v1036 = vsel %vm1020, %v1019, %v884
        %v1037 = vld [vmem:[%s2] sm:$0xff]
        %v1038 = vld [vmem:[%s3] sm:$0xff]
        %1040 = vset.pattern.permute.xlu0 0
        %1041 = vperm.xlu0 %1040, %v1038
        %v1042 = vpop.permute.xlu0 %1041
        %vm1044 = vcmask 293888
        %v1046 = vsel %vm1044, %v1037, 0
        %v1049 = vsel %vm1044, %v1021, 0
        %v1052 = vsel %vm1044, %v1022, 0
        %v1055 = vsel %vm1044, %v1023, 0
        %v1058 = vsel %vm1044, %v1024, 0
        %v1061 = vsel %vm1044, %v1025, 0
        %v1064 = vsel %vm1044, %v1026, 0
        %v1067 = vsel %vm1044, %v1027, 0
        %v1070 = vsel %vm1044, %v1028, 0
        %v1073 = vsel %vm1044, %v1029, 0
        %v1076 = vsel %vm1044, %v1030, 0
        %v1079 = vsel %vm1044, %v1031, 0
        %v1082 = vsel %vm1044, %v1032, 0
        %v1085 = vsel %vm1044, %v1033, 0
        %v1088 = vsel %vm1044, %v1034, 0
        %v1091 = vsel %vm1044, %v1035, 0
        %v1094 = vsel %vm1044, %v1036, 0
        %1096 = vmatprep.subr.mxu0 0.0
        %1097 = vmatpush1.xpose.msra.mxu0 %v1049
        %1098 = vmatprep.subr.mxu0 0.0
        %1099 = vmatpush1.xpose.msra.mxu0 %v1052
        %1100 = vmatprep.subr.mxu0 0.0
        %1101 = vmatpush1.xpose.msra.mxu0 %v1055
        %1102 = vmatprep.subr.mxu0 0.0
        %1103 = vmatpush1.xpose.msra.mxu0 %v1058
        %1104 = vmatprep.subr.mxu0 0.0
        %1105 = vmatpush1.xpose.msra.mxu0 %v1061
        %1106 = vmatprep.subr.mxu0 0.0
        %1107 = vmatpush1.xpose.msra.mxu0 %v1064
        %1108 = vmatprep.subr.mxu0 0.0
        %1109 = vmatpush1.xpose.msra.mxu0 %v1067
        %1110 = vmatprep.subr.mxu0 0.0
        %1111 = vmatpush1.xpose.msra.mxu0 %v1070
        %1112 = vmatprep.subr.mxu0 0.0
        %1113 = vmatpush1.xpose.msra.mxu0 %v1073
        %1114 = vmatprep.subr.mxu0 0.0
        %1115 = vmatpush1.xpose.msra.mxu0 %v1076
        %1116 = vmatprep.subr.mxu0 0.0
        %1117 = vmatpush1.xpose.msra.mxu0 %v1079
        %1118 = vmatprep.subr.mxu0 0.0
        %1119 = vmatpush1.xpose.msra.mxu0 %v1082
        %1120 = vmatprep.subr.mxu0 0.0
        %1121 = vmatpush1.xpose.msra.mxu0 %v1085
        %1122 = vmatprep.subr.mxu0 0.0
        %1123 = vmatpush1.xpose.msra.mxu0 %v1088
        %1124 = vmatprep.subr.mxu0 0.0
        %1125 = vmatpush1.xpose.msra.mxu0 %v1091
        %1126 = vmatprep.subr.mxu0 0.0
        %1127 = vmatpush1.xpose.msra.mxu0 %v1094
        %1128 = vmatprep.subr.mxu0 0.0
        %1129 = vmatpush1.xpose.msra.mxu0 0.0
        %1130 = vmatprep.subr.mxu0 0.0
        %1131 = vmatpush1.xpose.msra.mxu0 0.0
        %1132 = vmatprep.subr.mxu0 0.0
        %1133 = vmatpush1.xpose.msra.mxu0 0.0
        %1134 = vmatprep.subr.mxu0 0.0
        %1135 = vmatpush1.xpose.msra.mxu0 0.0
        %1136 = vmatprep.subr.mxu0 0.0
        %1137 = vmatpush1.xpose.msra.mxu0 0.0
        %1138 = vmatprep.subr.mxu0 0.0
        %1139 = vmatpush1.xpose.msra.mxu0 0.0
        %1140 = vmatprep.subr.mxu0 0.0
        %1141 = vmatpush1.xpose.msra.mxu0 0.0
        %1142 = vmatprep.subr.mxu0 0.0
        %1143 = vmatpush1.xpose.msra.mxu0 0.0
        %1144 = vmatprep.subr.mxu0 0.0
        %1145 = vmatpush1.xpose.msra.mxu0 0.0
        %1146 = vmatprep.subr.mxu0 0.0
        %1147 = vmatpush1.xpose.msra.mxu0 0.0
        %1148 = vmatprep.subr.mxu0 0.0
        %1149 = vmatpush1.xpose.msra.mxu0 0.0
        %1150 = vmatprep.subr.mxu0 0.0
        %1151 = vmatpush1.xpose.msra.mxu0 0.0
        %1152 = vmatprep.subr.mxu0 0.0
        %1153 = vmatpush1.xpose.msra.mxu0 0.0
        %1154 = vmatprep.subr.mxu0 0.0
        %1155 = vmatpush1.xpose.msra.mxu0 0.0
        %1156 = vmatprep.subr.mxu0 0.0
        %1157 = vmatpush1.xpose.msra.mxu0 0.0
        %1158 = vmatprep.subr.mxu0 0.0
        %1159 = vmatpush1.xpose.msra.mxu0 0.0
        %1160 = vmatprep.mubr.f32.mxu0 0.0
        %1161 = vmatmul.mubr.f32.gmra.mrb[0].mxu0 %v1046
        %v1162 = vpop.f32.mrb[0].mxu0
        %v1163 = vadd.f32 %v1042, %v1162
        %v1164 = vpop.f32.mrb[0].mxu0
        %1165 = vdwg.mxu0
        %1166 = vst [vmem:[%s300] sm:$0xff] %v1163
        %1167 = vadd.xlane.f32.xlu0 %v1163
        %v1168 = vpop.xlane.xlu0 %1167
        %v1169 = vmul.f32 %v1163, %v1163
        %1170 = vadd.xlane.f32.xlu0 %v1169
        %v1171 = vpop.xlane.xlu0 %1170
        %vm1172 = vcmask 7168
        %v1173 = vsel %vm1172, %v1168, %v1171
        %vm1174 = vcmask 15360
        %1175 = vst.msk [vmem:[%s354] sm:$0xff] %vm1174, %v1173
        %s1176 = sand.u32 %s144, 1
        %s1177 = scalar_lea.sflag [#allocation3], %s1176
        %s1178 = sand.u32 %s144, 1
        %s1179 = smul.addr %s1178, 8
        %s1180 = scalar_lea.vmem [#allocation2], %s1179
        %p1181 = scmp.lt.s32.totalorder %s24, 1
        %s1182 = scalar_select %p1181, %s24, 1
        %p1183 = scmp.lt.s32.totalorder %s25, 1
        %s1184 = scalar_select %p1183, %s25, 1
        %s1185 = smul.addr %s1182, 2
        %s1186 = sadd.s32 %s1184, %s1185
        %s1187 = smul.addr %s1186, 8
        %s1188 = scalar_lea.vmem %s5, %s1187
        // Predicated region
        $region37: #{tpu_custom_call.1} parent=35 // pred_check
          %p1189 = pneg %p154
        $region38: #{tpu_custom_call.1} parent=35 // pred_check_branch
          %1191 = sbr.rel (%p1189) target = $region40
        $region39: #{tpu_custom_call.1} parent=35 // pred_region
          %s1193 = ssub.s32 128, 128
          %1194 = vsyncadd %s1177, %s1193
          %s1195 = smul.addr %s24, 2
          %s1196 = sadd.s32 %s25, %s1195
          %s1197 = smul.addr %s1196, 128
          %s1198 = scalar_lea.hbm %s4, %s1197
          %s1200 = sshll.u32 %s1180, 4
          %s1201 = int_to_ptr.vmem [resolvable:$true] %s1200
          %1203 = dma.vmem_to_hbm [thread:$0]  %s1201, 128, %s1198, %s1177
        $region40: #{tpu_custom_call.1} parent=35 // pred_fallthru
          _
        // Predicated region
        $region41: #{tpu_custom_call.1} parent=35 // pred_check
          %p1204 = pneg %p182
        $region42: #{tpu_custom_call.1} parent=35 // pred_check_branch
          %1206 = sbr.rel (%p1204) target = $region44
        $region43: #{tpu_custom_call.1} parent=35 // pred_region
          _
        $region44: #{tpu_custom_call.1} parent=35 // pred_fallthru
          _
      $region36: #{tpu_custom_call.1} parent=5 // pred_fallthru
        _
      %p1207 = scmp.le.s32.totalorder 2, %s15
      // Predicated region
      $region45: #{tpu_custom_call.1} parent=5 // pred_check
        %p1208 = pneg %p1207
      $region46: #{tpu_custom_call.1} parent=5 // pred_check_branch
        %1210 = sbr.rel (%p1208) target = $region48
      $region47: #{tpu_custom_call.1} parent=5 // pred_region
        %s1211 = ssub.s32 %s15, 2
        // Predicated region
        $region49: #{tpu_custom_call.1} parent=47 // pred_check
          %p1212 = pneg %p160
        $region50: #{tpu_custom_call.1} parent=47 // pred_check_branch
          %1214 = sbr.rel (%p1212) target = $region52
        $region51: #{tpu_custom_call.1} parent=47 // pred_region
          %s1215 = sand.u32 %s145, 1
          %s1216 = scalar_lea.sflag [#allocation3], %s1215
          %s1217 = sand.u32 %s145, 1
          %s1218 = smul.addr %s1217, 8
          %s1219 = scalar_lea.vmem [#allocation2], %s1218
          %1220 = dma.done %s1216, 128
        $region52: #{tpu_custom_call.1} parent=47 // pred_fallthru
          _
        // Predicated region
        $region53: #{tpu_custom_call.1} parent=47 // pred_check
          %p1221 = pneg %p188
        $region54: #{tpu_custom_call.1} parent=47 // pred_check_branch
          %1223 = sbr.rel (%p1221) target = $region56
        $region55: #{tpu_custom_call.1} parent=47 // pred_region
          %p1224 = scmp.lt.s32.totalorder %s26, 1
          %s1225 = scalar_select %p1224, %s26, 1
          %p1226 = scmp.lt.s32.totalorder %s27, 1
          %s1227 = scalar_select %p1226, %s27, 1
          %s1228 = smul.addr %s1225, 2
          %s1229 = sadd.s32 %s1227, %s1228
          %s1230 = smul.addr %s1229, 8
          %s1231 = scalar_lea.vmem %s5, %s1230
        $region56: #{tpu_custom_call.1} parent=47 // pred_fallthru
          _
      $region48: #{tpu_custom_call.1} parent=5 // pred_fallthru
        _
    $region6: #{tpu_custom_call.1} parent=1 // loop_footer
      %s19 = sadd.s32 1, %s15
    $region7: #{tpu_custom_call.1} parent=1 // loop_footer_branch
      %14 = sbr.rel target = $region3
    $region8: #{tpu_custom_call.1} parent=1 // loop_exit
      _
    %1232 = vsyncpa [#allocation3], 1
    %s1233 = scalar_lea.sflag [#allocation3], 1
    %1234 = vsyncpa %s1233, 1

</llo_original>
